<compile_context>
chip_gen: v5e
topology: v5e:2x2
jax: 0.10.0
libtpu: 0.0.40
codegen_flags: <defaults>
</compile_context>

<pallas_src>
from typing import NamedTuple

import jax
import jax.numpy as jnp
from jax.experimental import pallas as pl
from jax.experimental.pallas import tpu as pltpu


class MultivariateNormalParams(NamedTuple):
    """Parameters of the prior MVN (stand-in for torch.distributions.MultivariateNormal)."""
    loc: jax.Array                # (B, S)
    covariance_matrix: jax.Array  # (B, S, S)


def _cauchy_cov_kernel(params_ref, tcol_ref, trow_ref, cov_ref):
    """Compute one (TI, TJ) tile of the Cauchy kernel matrix for one batch element.

    params_ref : SMEM (3,) f32  -> [lengthscale, variance, alpha]
    tcol_ref   : VMEM (TI, 1)   -> times for the row-tile
    trow_ref   : VMEM (1, TJ)   -> times for the column-tile
    cov_ref    : VMEM (TI, TJ)  -> output tile
    """
    lengthscale = params_ref[0]
    variance = params_ref[1]
    alpha = params_ref[2]

    ti, tj = cov_ref.shape

    t_col = tcol_ref[...].astype(jnp.float32)   # (TI, 1)
    t_row = trow_ref[...].astype(jnp.float32)   # (1, TJ)

    # diff[i, j] = t[i] - t[j]; matches torch: t1 - t2.transpose(1, 2)
    d = (t_col - t_row) / lengthscale           # (TI, TJ)
    cov = (variance * variance) / (1.0 + d * d)

    # + alpha * I using global row/col indices (correct for any tiling).
    i0 = pl.program_id(1) * ti
    j0 = pl.program_id(2) * tj
    rows = jax.lax.broadcasted_iota(jnp.int32, (ti, tj), 0) + i0
    cols = jax.lax.broadcasted_iota(jnp.int32, (ti, tj), 1) + j0
    cov = jnp.where(rows == cols, cov + alpha, cov)

    cov_ref[...] = cov.astype(cov_ref.dtype)


def _pick_tile(s: int, candidates, align: int) -> int:
    """Largest candidate tile that divides s, if s is aligned; else the full dim."""
    if s % align != 0:
        return s
    for c in candidates:
        if c <= s and s % c == 0:
            return c
    return s


def gaussian_process_prior(t: jax.Array,
                           lengthscale: float = 1.0,
                           variance: float = 1.0,
                           alpha: float = 0.01,
                           z_dimension: int = 1):
    """Pallas implementation of GaussianProcessPriorMaison.forward.

    Args:
        t: times, shape (batch, seq, 1).
        lengthscale, variance: learnable CauchyKernel scalars.
        alpha: diagonal jitter.
        z_dimension: latent dimension of the (null) mean function.
    Returns:
        (mean, covariance, prior_distribution_params)
    """
    assert t.ndim == 3, "Input tensor must have shape (batch, seq, 1)"
    assert t.shape[-1] == 1, "Input tensor must have last dimension = 1 (set of times)"
    b, s, _ = t.shape

    # Tile sizes: lane dim a multiple of 128 when possible (lane-dense stores),
    # sublane dim a multiple of 8; otherwise full-extent blocks.
    tj = _pick_tile(s, (512, 256, 128), 128)
    ti = _pick_tile(s, (256, 128, 64, 32, 16, 8), 8)

    params = jnp.asarray([lengthscale, variance, alpha], dtype=jnp.float32)
    t_col = t                                  # (B, S, 1)
    t_row = jnp.reshape(t, (b, 1, s))          # (B, 1, S) -- cheap wrapper reshape

    covariance = pl.pallas_call(
        _cauchy_cov_kernel,
        out_shape=jax.ShapeDtypeStruct((b, s, s), t.dtype),
        grid=(b, s // ti, s // tj),
        in_specs=[
            pl.BlockSpec(memory_space=pltpu.MemorySpace.SMEM),              # params (3,)
            pl.BlockSpec((None, ti, 1), lambda bb, i, j: (bb, i, 0)),       # t column tile
            pl.BlockSpec((None, 1, tj), lambda bb, i, j: (bb, 0, j)),       # t row tile
        ],
        out_specs=pl.BlockSpec((None, ti, tj), lambda bb, i, j: (bb, i, j)),
        compiler_params=pltpu.CompilerParams(
            dimension_semantics=("parallel", "parallel", "parallel")),
    )(params, t_col, t_row)

    # GPNullMean: all-zeros mean. Per perf review, a pure zero-fill is left to XLA
    # (no input DMA, no masked narrow stores, fusable with consumers).
    mean = jnp.zeros((b, s, int(z_dimension)), dtype=t.dtype)

    # TODO(synk): torch.distributions.MultivariateNormal has no Pallas/JAX-kernel equivalent;
    # we return its parameters (loc, covariance_matrix) instead of a distribution object.
    prior = MultivariateNormalParams(loc=jnp.squeeze(mean, -1), covariance_matrix=covariance)
    return mean, covariance, prior


def _reference(t, lengthscale, variance, alpha, z_dimension=1):
    diff = t - jnp.swapaxes(t, 1, 2)
    cov = (variance ** 2) / (1.0 + (diff / lengthscale) ** 2)
    cov = cov + alpha * jnp.eye(t.shape[1], dtype=t.dtype)[None]
    mean = jnp.zeros((t.shape[0], t.shape[1], z_dimension), dtype=t.dtype)
    return mean, cov


if __name__ == "__main__":
    key = jax.random.PRNGKey(0)
    batch, seq = 2, 8
    lengthscale, variance, alpha = 0.7, 1.3, 0.01

    t = jax.random.uniform(key, (batch, seq, 1), dtype=jnp.float32)

    mean, cov, prior = gaussian_process_prior(
        t, lengthscale=lengthscale, variance=variance, alpha=alpha, z_dimension=1)
    cov = jax.block_until_ready(cov)
    mean = jax.block_until_ready(mean)

    mean_ref, cov_ref = _reference(t, lengthscale, variance, alpha)

    assert mean.shape == (batch, seq, 1), mean.shape
    assert cov.shape == (batch, seq, seq), cov.shape
    assert mean.dtype == t.dtype and cov.dtype == t.dtype
    assert bool(jnp.all(mean == 0.0)), "mean must be all zeros"
    assert bool(jnp.allclose(cov, cov_ref, rtol=1e-5, atol=1e-6)), "covariance mismatch"
    assert prior.loc.shape == (batch, seq)
    assert prior.covariance_matrix.shape == (batch, seq, seq)

    print("KERNEL_OK")
</pallas_src>

<mosaic_0001>
module attributes {stable_mosaic.version = 11 : i64} {
  func.func @_cauchy_cov_kernel(%arg0: i32, %arg1: i32, %arg2: i32, %arg3: memref<3xf32, #tpu.memory_space<smem>>, %arg4: memref<1x8x1xf32, #tpu.memory_space<vmem>>, %arg5: memref<1x1x8xf32, #tpu.memory_space<vmem>>, %arg6: memref<1x8x8xf32, #tpu.memory_space<vmem>>) attributes {dimension_semantics = [#tpu.dimension_semantics<parallel>, #tpu.dimension_semantics<parallel>, #tpu.dimension_semantics<parallel>], iteration_bounds = array<i64: 2, 1, 1>, scalar_prefetch = 0 : i64, scratch_operands = 0 : i64, tpu.core_type = #tpu.core_type<tc>, window_params = [{transform_indices = @transform_0, window_bounds = array<i64: 3>}, {transform_indices = @transform_1, window_bounds = array<i64: 1, 8, 1>}, {transform_indices = @transform_2, window_bounds = array<i64: 1, 1, 8>}, {transform_indices = @transform_3, window_bounds = array<i64: 1, 8, 8>}]} {
    %c0 = arith.constant 0 : index
    %0 = memref.load %arg3[%c0] : memref<3xf32, #tpu.memory_space<smem>>
    %c1 = arith.constant 1 : index
    %1 = memref.load %arg3[%c1] : memref<3xf32, #tpu.memory_space<smem>>
    %c2 = arith.constant 2 : index
    %2 = memref.load %arg3[%c2] : memref<3xf32, #tpu.memory_space<smem>>
    %c0_0 = arith.constant 0 : index
    %c0_1 = arith.constant 0 : index
    %c0_2 = arith.constant 0 : index
    %3 = vector.load %arg4[%c0_0, %c0_1, %c0_2] : memref<1x8x1xf32, #tpu.memory_space<vmem>>, vector<1x8x1xf32>
    %4 = vector.shape_cast %3 : vector<1x8x1xf32> to vector<8x1xf32>
    %c0_3 = arith.constant 0 : index
    %c0_4 = arith.constant 0 : index
    %c0_5 = arith.constant 0 : index
    %5 = vector.load %arg5[%c0_3, %c0_4, %c0_5] : memref<1x1x8xf32, #tpu.memory_space<vmem>>, vector<1x1x8xf32>
    %6 = vector.shape_cast %5 : vector<1x1x8xf32> to vector<1x8xf32>
    %7 = vector.broadcast %4 : vector<8x1xf32> to vector<8x8xf32>
    %8 = vector.broadcast %6 : vector<1x8xf32> to vector<8x8xf32>
    %9 = arith.subf %7, %8 : vector<8x8xf32>
    %10 = vector.broadcast %0 : f32 to vector<8x8xf32>
    %11 = arith.divf %9, %10 : vector<8x8xf32>
    %12 = arith.mulf %1, %1 : f32
    %13 = arith.mulf %11, %11 : vector<8x8xf32>
    %cst = arith.constant 1.000000e+00 : f32
    %14 = vector.broadcast %cst : f32 to vector<8x8xf32>
    %15 = arith.addf %14, %13 : vector<8x8xf32>
    %16 = vector.broadcast %12 : f32 to vector<8x8xf32>
    %17 = arith.divf %16, %15 : vector<8x8xf32>
    %c8_i32 = arith.constant 8 : i32
    %18 = arith.muli %arg1, %c8_i32 : i32
    %c8_i32_6 = arith.constant 8 : i32
    %19 = arith.muli %arg2, %c8_i32_6 : i32
    %20 = tpu.iota {dimensions = array<i32: 0>} : vector<8x8xi32>
    %21 = vector.broadcast %18 : i32 to vector<8x8xi32>
    %22 = arith.addi %20, %21 : vector<8x8xi32>
    %23 = tpu.iota {dimensions = array<i32: 1>} : vector<8x8xi32>
    %24 = vector.broadcast %19 : i32 to vector<8x8xi32>
    %25 = arith.addi %23, %24 : vector<8x8xi32>
    %26 = arith.cmpi eq, %22, %25 : vector<8x8xi32>
    %27 = vector.broadcast %2 : f32 to vector<8x8xf32>
    %28 = arith.addf %17, %27 : vector<8x8xf32>
    %29 = arith.select %26, %28, %17 : vector<8x8xi1>, vector<8x8xf32>
    %c0_7 = arith.constant 0 : index
    %c0_8 = arith.constant 0 : index
    %c0_9 = arith.constant 0 : index
    %30 = vector.load %arg6[%c0_7, %c0_8, %c0_9] : memref<1x8x8xf32, #tpu.memory_space<vmem>>, vector<1x8x8xf32>
    %31 = vector.shape_cast %30 : vector<1x8x8xf32> to vector<8x8xf32>
    %32 = vector.shape_cast %29 : vector<8x8xf32> to vector<1x8x8xf32>
    tpu.vector_store %arg6[%c0_7, %c0_8, %c0_9], %32 {strides = array<i32>} : memref<1x8x8xf32, #tpu.memory_space<vmem>>, vector<1x8x8xf32>,
    return
  }
  func.func @transform_0(%arg0: i32, %arg1: i32, %arg2: i32) -> i32 {
    %c0_i32 = arith.constant 0 : i32
    %c0_i32_0 = arith.constant 0 : i32
    return %c0_i32 : i32
  }
  func.func @transform_1(%arg0: i32, %arg1: i32, %arg2: i32) -> (i32, i32, i32) {
    %c0_i32 = arith.constant 0 : i32
    %c0_i32_0 = arith.constant 0 : i32
    return %arg0, %arg1, %c0_i32 : i32, i32, i32
  }
  func.func @transform_2(%arg0: i32, %arg1: i32, %arg2: i32) -> (i32, i32, i32) {
    %c0_i32 = arith.constant 0 : i32
    %c0_i32_0 = arith.constant 0 : i32
    return %arg0, %c0_i32, %arg2 : i32, i32, i32
  }
  func.func @transform_3(%arg0: i32, %arg1: i32, %arg2: i32) -> (i32, i32, i32) {
    %c0_i32 = arith.constant 0 : i32
    return %arg0, %arg1, %arg2 : i32, i32, i32
  }
}

</mosaic_0001>

<llo_original>
// kernel: tpu_custom_call.1
$region0: #{tpu_custom_call.1}
  #allocation0 [shape = 'u32[]', space=smem, size = 0x4, offset = 0x4, fixed_abs, tag = 'smem constant byte address 0x4 - core index']
  #allocation1 [shape = 'u32[72,128]{1,0:T(1,128)}', space=vmem, size = 0x9000, scoped, tag = 'internal scratch']
  %s0 = inlined_call_operand.vmem [shape: f32[3], index: 0, kind: input, shape index: {}]
  %s1 = inlined_call_operand.vmem [shape: f32[2,8,1], index: 1, kind: input, shape index: {}]
  %s2 = inlined_call_operand.vmem [shape: f32[2,1,8], index: 2, kind: input, shape index: {}]
  %s3 = inlined_call_operand.hbm [shape: f32[2,8,8], index: 3, kind: output, shape index: {}]
  %s4 = sld [smem:[#allocation0]]
  $region49: #{tpu_custom_call.1} parent=0
    _
  %s6 = ssub.s32 1, %s4
  %s7 = scalar_select 0, %s6, %s4
  $region1: #{tpu_custom_call.1} parent=0
    #allocation2 [shape = 'u8[512]{0}', space=smem, size = 0x200, scoped, tag = 'input window, operand 0, single buffered']
    #allocation3 [shape = 's32[2]{0}', space=sflag, size = 0x8, scoped, tag = 'scoped memory for tpu_custom_call.1']
    #allocation4 [shape = 's32[2]{0}', space=sflag, size = 0x8, scoped, tag = 'scoped memory for tpu_custom_call.1']
    #allocation5 [shape = 'u8[8192]{0}', space=vmem, size = 0x2000, scoped, tag = 'output window, operand 0']
    %8 = vsyncpa [#allocation4], 0
    %9 = vsyncpa [#allocation3], 0
    %s10 = scalar_lea.sflag [#allocation3], 1
    %11 = vsyncpa %s10, 0
    loop: start=0, step=1, limit=4
    $region2: #{tpu_custom_call.1} parent=1 // loop_pre_header
      _
    $region3: #{tpu_custom_call.1} parent=1 // loop_header
      %s13 = sphi 0, %s17
      %p14 = scmp.ge.s32.totalorder %s13, 4
      %s20 = sphi 0, %s39
      %s21 = sphi 0, %s35
      %s22 = sphi 0, %s31
      %s23 = sphi 0, %s20
      %s24 = sphi 0, %s21
      %s25 = sphi 0, %s22
      %s26 = sphi 0, %s23
      %s27 = sphi 0, %s24
      %s28 = sphi 0, %s25
      %s40 = sphi 0, %s40
      %s42 = sphi 0, %s40
      %s43 = sphi 0, %s42
      %s57 = sphi 0, %s43
      %s65 = sphi 0, %s67
      %s68 = sphi 0, %s65
      %s69 = sphi 0, %s68
      %s85 = sphi 0, %s69
      %s93 = sphi 0, %s95
      %s96 = sphi 0, %s93
      %s97 = sphi 0, %s96
      %s113 = sphi 0, %s97
      %s123 = sphi 0, %s125
      %s126 = sphi 0, %s123
      %s127 = sphi 0, %s126
      %s143 = sphi 0, %s127
    $region4: #{tpu_custom_call.1} parent=1 // loop_header_branch
      %16 = sbr.rel (%p14) target = $region8
    $region5: #{tpu_custom_call.1} parent=1 // loop_body
      %s18 = ssub.s32 %s13, 1
      %s19 = ssub.s32 %s13, 2
      %s29 = sadd.s32 1, %s22
      %p30 = scmp.ge.s32.totalorder %s29, 1
      %s31 = scalar_select %p30, 0, %s29
      %s32 = sadd.s32 1, %s21
      %s33 = scalar_select %p30, %s32, %s21
      %p34 = scmp.ge.s32.totalorder %s33, 1
      %s35 = scalar_select %p34, 0, %s33
      %s36 = sadd.s32 1, %s20
      %s37 = scalar_select %p34, %s36, %s20
      %p38 = scmp.ge.s32.totalorder %s37, 2
      %s39 = scalar_select %p38, 0, %s37
      %s41 = sadd.s32 %s40, 1
      %p44 = scmp.eq.s32.totalorder %s13, 1
      %p45 = scmp.ne.s32.totalorder %s40, %s42
      %p46 = scmp.eq.s32.totalorder %s13, 0
      %p47 = por %p45, %p46
      %p48 = scmp.ne.s32.totalorder %s40, %s42
      %p49 = scmp.eq.s32.totalorder %s18, 1
      %p50 = por %p48, %p49
      %p51 = scmp.ne.s32.totalorder %s42, %s43
      %p52 = scmp.eq.s32.totalorder %s18, 0
      %p53 = por %p51, %p52
      %p54 = scmp.ne.s32.totalorder %s42, %s43
      %p55 = scmp.eq.s32.totalorder %s19, 1
      %p56 = por %p54, %p55
      %p58 = scmp.ne.s32.totalorder %s43, %s57
      %p59 = scmp.eq.s32.totalorder %s19, 0
      %p60 = por %p58, %p59
      %s61 = ssub.s32 %s20, %s39
      %s62 = ssub.s32 %s21, %s35
      %s63 = sor.u32 %s61, %s62
      %p64 = scmp.eq.s32.totalorder %s63, 0
      %s66 = sadd.s32 %s65, 1
      %s67 = scalar_select %p64, %s65, %s66
      %p70 = pneg %p64
      %p71 = scmp.eq.s32.totalorder %s13, 1
      %p72 = por %p70, %p71
      %p73 = scmp.ne.s32.totalorder %s65, %s68
      %p74 = scmp.eq.s32.totalorder %s13, 0
      %p75 = por %p73, %p74
      %p76 = scmp.ne.s32.totalorder %s65, %s68
      %p77 = scmp.eq.s32.totalorder %s18, 1
      %p78 = por %p76, %p77
      %p79 = scmp.ne.s32.totalorder %s68, %s69
      %p80 = scmp.eq.s32.totalorder %s18, 0
      %p81 = por %p79, %p80
      %p82 = scmp.ne.s32.totalorder %s68, %s69
      %p83 = scmp.eq.s32.totalorder %s19, 1
      %p84 = por %p82, %p83
      %p86 = scmp.ne.s32.totalorder %s69, %s85
      %p87 = scmp.eq.s32.totalorder %s19, 0
      %p88 = por %p86, %p87
      %s89 = ssub.s32 %s20, %s39
      %s90 = ssub.s32 %s22, %s31
      %s91 = sor.u32 %s89, %s90
      %p92 = scmp.eq.s32.totalorder %s91, 0
      %s94 = sadd.s32 %s93, 1
      %s95 = scalar_select %p92, %s93, %s94
      %p98 = pneg %p92
      %p99 = scmp.eq.s32.totalorder %s13, 1
      %p100 = por %p98, %p99
      %p101 = scmp.ne.s32.totalorder %s93, %s96
      %p102 = scmp.eq.s32.totalorder %s13, 0
      %p103 = por %p101, %p102
      %p104 = scmp.ne.s32.totalorder %s93, %s96
      %p105 = scmp.eq.s32.totalorder %s18, 1
      %p106 = por %p104, %p105
      %p107 = scmp.ne.s32.totalorder %s96, %s97
      %p108 = scmp.eq.s32.totalorder %s18, 0
      %p109 = por %p107, %p108
      %p110 = scmp.ne.s32.totalorder %s96, %s97
      %p111 = scmp.eq.s32.totalorder %s19, 1
      %p112 = por %p110, %p111
      %p114 = scmp.ne.s32.totalorder %s97, %s113
      %p115 = scmp.eq.s32.totalorder %s19, 0
      %p116 = por %p114, %p115
      %s117 = ssub.s32 %s20, %s39
      %s118 = ssub.s32 %s21, %s35
      %s119 = sor.u32 %s117, %s118
      %s120 = ssub.s32 %s22, %s31
      %s121 = sor.u32 %s119, %s120
      %p122 = scmp.eq.s32.totalorder %s121, 0
      %s124 = sadd.s32 %s123, 1
      %s125 = scalar_select %p122, %s123, %s124
      %p128 = pneg %p122
      %p129 = scmp.eq.s32.totalorder %s13, 1
      %p130 = por %p128, %p129
      %p131 = scmp.ne.s32.totalorder %s123, %s126
      %p132 = scmp.eq.s32.totalorder %s13, 0
      %p133 = por %p131, %p132
      %p134 = scmp.ne.s32.totalorder %s123, %s126
      %p135 = scmp.eq.s32.totalorder %s18, 1
      %p136 = por %p134, %p135
      %p137 = scmp.ne.s32.totalorder %s126, %s127
      %p138 = scmp.eq.s32.totalorder %s18, 0
      %p139 = por %p137, %p138
      %p140 = scmp.ne.s32.totalorder %s126, %s127
      %p141 = scmp.eq.s32.totalorder %s19, 1
      %p142 = por %p140, %p141
      %p144 = scmp.ne.s32.totalorder %s127, %s143
      %p145 = scmp.eq.s32.totalorder %s19, 0
      %p146 = por %p144, %p145
      %p147 = scmp.le.s32.totalorder 1, %s13
      %p148 = scmp.lt.s32.totalorder %s13, 3
      %p149 = pnand %p147, %p148
      %p150 = pneg %p149
      // Predicated region
      $region9: #{tpu_custom_call.1} parent=5 // pred_check
        _
      $region10: #{tpu_custom_call.1} parent=5 // pred_check_branch
        %152 = sbr.rel (%p149) target = $region12
      $region11: #{tpu_custom_call.1} parent=5 // pred_region
        %s153 = ssub.s32 %s13, 1
        // Predicated region
        $region13: #{tpu_custom_call.1} parent=11 // pred_check
          %p154 = pneg %p53
        $region14: #{tpu_custom_call.1} parent=11 // pred_check_branch
          %156 = sbr.rel (%p154) target = $region16
        $region15: #{tpu_custom_call.1} parent=11 // pred_region
          %158 = vsyncadd [#allocation4], 0
          %s160 = sshll.u32 %s0, 4
          %s161 = int_to_ptr.vmem [resolvable:$true] %s160
          %163 = dma.vmem_to_smem %s161, 16, [#allocation2], [#allocation4]
        $region16: #{tpu_custom_call.1} parent=11 // pred_fallthru
          _
      $region12: #{tpu_custom_call.1} parent=5 // pred_fallthru
        _
      %p164 = scmp.lt.s32.totalorder %s13, 2
      // Predicated region
      $region17: #{tpu_custom_call.1} parent=5 // pred_check
        %p165 = pneg %p164
      $region18: #{tpu_custom_call.1} parent=5 // pred_check_branch
        %167 = sbr.rel (%p165) target = $region20
      $region19: #{tpu_custom_call.1} parent=5 // pred_region
        // Predicated region
        $region21: #{tpu_custom_call.1} parent=19 // pred_check
          %p168 = pneg %p75
        $region22: #{tpu_custom_call.1} parent=19 // pred_check_branch
          %170 = sbr.rel (%p168) target = $region24
        $region23: #{tpu_custom_call.1} parent=19 // pred_region
          %p171 = scmp.lt.s32.totalorder %s20, 1
          %s172 = scalar_select %p171, %s20, 1
          %p173 = scmp.lt.s32.totalorder %s21, 0
          %s174 = scalar_select %p173, %s21, 0
          %s175 = sadd.s32 %s174, %s172
          %s176 = smul.addr %s175, 8
          %s177 = scalar_lea.vmem %s1, %s176
        $region24: #{tpu_custom_call.1} parent=19 // pred_fallthru
          _
        // Predicated region
        $region25: #{tpu_custom_call.1} parent=19 // pred_check
          %p178 = pneg %p103
        $region26: #{tpu_custom_call.1} parent=19 // pred_check_branch
          %180 = sbr.rel (%p178) target = $region28
        $region27: #{tpu_custom_call.1} parent=19 // pred_region
          %p181 = scmp.lt.s32.totalorder %s20, 1
          %s182 = scalar_select %p181, %s20, 1
          %p183 = scmp.lt.s32.totalorder %s22, 0
          %s184 = scalar_select %p183, %s22, 0
          %s185 = sadd.s32 %s184, %s182
          %s186 = scalar_lea.vmem %s2, %s185
        $region28: #{tpu_custom_call.1} parent=19 // pred_fallthru
          _
      $region20: #{tpu_custom_call.1} parent=5 // pred_fallthru
        _
      %p187 = scmp.le.s32.totalorder 1, %s13
      %p188 = scmp.lt.s32.totalorder %s13, 3
      %p189 = pnand %p187, %p188
      %p190 = pneg %p189
      // Predicated region
      $region29: #{tpu_custom_call.1} parent=5 // pred_check
        _
      $region30: #{tpu_custom_call.1} parent=5 // pred_check_branch
        %192 = sbr.rel (%p189) target = $region32
      $region31: #{tpu_custom_call.1} parent=5 // pred_region
        %s193 = ssub.s32 %s13, 1
        // Predicated region
        $region33: #{tpu_custom_call.1} parent=31 // pred_check
          %p194 = pneg %p53
        $region34: #{tpu_custom_call.1} parent=31 // pred_check_branch
          %196 = sbr.rel (%p194) target = $region36
        $region35: #{tpu_custom_call.1} parent=31 // pred_region
          %198 = dma.done [#allocation4], 16
        $region36: #{tpu_custom_call.1} parent=31 // pred_fallthru
          _
        %199 = sfence
        %p200 = pneg %p53
        %p201 = pneg %p50
        %p202 = scmp.lt.s32.totalorder %s23, 1
        %s203 = scalar_select %p202, %s23, 1
        %p204 = scmp.lt.s32.totalorder %s24, 0
        %s205 = scalar_select %p204, %s24, 0
        %s206 = sadd.s32 %s205, %s203
        %s207 = smul.addr %s206, 8
        %s208 = scalar_lea.vmem %s1, %s207
        %p209 = pneg %p81
        %p210 = pneg %p78
        %p211 = scmp.lt.s32.totalorder %s23, 1
        %s212 = scalar_select %p211, %s23, 1
        %p213 = scmp.lt.s32.totalorder %s25, 0
        %s214 = scalar_select %p213, %s25, 0
        %s215 = sadd.s32 %s214, %s212
        %s216 = scalar_lea.vmem %s2, %s215
        %p217 = pneg %p109
        %p218 = pneg %p106
        %p219 = pneg %p139
        %p220 = pneg %p136
        %s221 = sand.u32 %s126, 1
        %s222 = scalar_lea.sflag [#allocation3], %s221
        %s223 = sand.u32 %s126, 1
        %s224 = smul.addr %s223, 8
        %s225 = scalar_lea.vmem [#allocation5], %s224
        %p226 = scmp.lt.s32.totalorder %s23, 1
        %s227 = scalar_select %p226, %s23, 1
        %p228 = scmp.lt.s32.totalorder %s24, 0
        %s229 = scalar_select %p228, %s24, 0
        %s230 = sadd.s32 %s229, %s227
        %s231 = smul.addr %s230, 8
        %s232 = scalar_lea.vmem %s1, %s231
        %p233 = scmp.lt.s32.totalorder %s23, 1
        %s234 = scalar_select %p233, %s23, 1
        %p235 = scmp.lt.s32.totalorder %s25, 0
        %s236 = scalar_select %p235, %s25, 0
        %s237 = sadd.s32 %s236, %s234
        %s238 = scalar_lea.vmem %s2, %s237
        %s239 = sld [smem:[#allocation2]]
        %s240 = sld [smem:[#allocation2 + $0x1]]
        %s241 = sld [smem:[#allocation2 + $0x2]]
        %v242 = vld [vmem:[%s232] sm:$0xff]
        %v243 = vld [vmem:[%s238] sm:$0x1]
        %245 = vset.pattern.permute.xlu0 0
        %246 = vperm.xlu0 %245, %v242
        %v247 = vpop.permute.xlu0 %246
        %v250 = vperm.slane %v243, 0
        %v252 = vsub.f32 %v247, %v250
        %v253 = vstv %s239
        %v254 = vrcp.pop %v253
        %v255 = vmul.f32 %v253, %v254
        %v256 = vsub.f32 1.0, %v255
        %v257 = vmul.f32 %v254, %v256
        %v258 = vadd.f32 %v254, %v257
        %vm259 = vweird.f32 %v253
        %vm260 = vweird.f32 %v254
        %vm261 = vmor %vm259, %vm260
        %v262 = vsel %vm261, %v254, %v258
        %v263 = vand.u32 2147483647, %v253
        %vm264 = vcmp.eq.f32.partialorder %v263, 8.507059e+37
        %v265 = vand.u32 %v253, 2147483648
        %v266 = vor.u32 1.1754944e-38, %v265
        %v267 = vsel %vm264, %v266, %v262
        %v268 = vmul.f32 %v252, %v267
        %s269 = smul.f32 %s240, %s240
        %v270 = vmul.f32 %v268, %v268
        %v271 = vadd.f32 %v270, 1.0
        %v272 = vstv %s269
        %v273 = vrcp.pop %v271
        %v274 = vmul.f32 %v271, %v273
        %v275 = vsub.f32 1.0, %v274
        %v276 = vmul.f32 %v273, %v275
        %v277 = vadd.f32 %v273, %v276
        %vm278 = vweird.f32 %v271
        %vm279 = vweird.f32 %v273
        %vm280 = vmor %vm278, %vm279
        %v281 = vsel %vm280, %v273, %v277
        %v282 = vand.u32 2147483647, %v271
        %vm283 = vcmp.eq.f32.partialorder %v282, 8.507059e+37
        %v284 = vand.u32 %v271, 2147483648
        %v285 = vor.u32 1.1754944e-38, %v284
        %v286 = vsel %vm283, %v285, %v281
        %v287 = vmul.f32 %v272, %v286
        %s288 = smul.u32 %s24, 8
        %s289 = smul.u32 %s25, 8
        %v290 = vlaneseq
        %v291 = vshrl.u32 %v290, 7
        %v292 = vstv %s288
        %v293 = vadd.s32 %v291, %v292
        %v294 = vlaneseq
        %v295 = vand.u32 %v294, 127
        %v296 = vstv %s289
        %v297 = vadd.s32 %v295, %v296
        %vm298 = vcmp.eq.s32.totalorder %v293, %v297
        %v299 = vstv %s241
        %v300 = vadd.f32 %v287, %v299
        %v301 = vsel %vm298, %v300, %v287
        %vm302 = vcmask 64512
        %303 = vst.msk [vmem:[%s225] sm:$0xff] %vm302, %v301
        %s304 = sand.u32 %s126, 1
        %s305 = scalar_lea.sflag [#allocation3], %s304
        %s306 = sand.u32 %s126, 1
        %s307 = smul.addr %s306, 8
        %s308 = scalar_lea.vmem [#allocation5], %s307
        // Predicated region
        $region37: #{tpu_custom_call.1} parent=31 // pred_check
          %p309 = pneg %p136
        $region38: #{tpu_custom_call.1} parent=31 // pred_check_branch
          %311 = sbr.rel (%p309) target = $region40
        $region39: #{tpu_custom_call.1} parent=31 // pred_region
          %313 = vsyncadd %s305, 0
          %s314 = sadd.s32 %s25, %s24
          %s315 = sadd.s32 %s314, %s23
          %s316 = smul.addr %s315, 8
          %s317 = scalar_lea.hbm %s3, %s316
          %s319 = sshll.u32 %s308, 4
          %s320 = int_to_ptr.vmem [resolvable:$true] %s319
          %s321 = sshll.u32 %s317, 4
          %s322 = int_to_ptr.hbm [resolvable:$true] %s321
          %324 = dma.vmem_to_hbm [thread:$0]  %s320, 128, %s322, %s305
        $region40: #{tpu_custom_call.1} parent=31 // pred_fallthru
          _
      $region32: #{tpu_custom_call.1} parent=5 // pred_fallthru
        _
      %p325 = scmp.le.s32.totalorder 2, %s13
      // Predicated region
      $region41: #{tpu_custom_call.1} parent=5 // pred_check
        %p326 = pneg %p325
      $region42: #{tpu_custom_call.1} parent=5 // pred_check_branch
        %328 = sbr.rel (%p326) target = $region44
      $region43: #{tpu_custom_call.1} parent=5 // pred_region
        %s329 = ssub.s32 %s13, 2
        // Predicated region
        $region45: #{tpu_custom_call.1} parent=43 // pred_check
          %p330 = pneg %p142
        $region46: #{tpu_custom_call.1} parent=43 // pred_check_branch
          %332 = sbr.rel (%p330) target = $region48
        $region47: #{tpu_custom_call.1} parent=43 // pred_region
          %s333 = sand.u32 %s127, 1
          %s334 = scalar_lea.sflag [#allocation3], %s333
          %s335 = sand.u32 %s127, 1
          %s336 = smul.addr %s335, 8
          %s337 = scalar_lea.vmem [#allocation5], %s336
          %339 = dma.done %s334, 128
        $region48: #{tpu_custom_call.1} parent=43 // pred_fallthru
          _
      $region44: #{tpu_custom_call.1} parent=5 // pred_fallthru
        _
    $region6: #{tpu_custom_call.1} parent=1 // loop_footer
      %s17 = sadd.s32 1, %s13
    $region7: #{tpu_custom_call.1} parent=1 // loop_footer_branch
      %12 = sbr.rel target = $region3
    $region8: #{tpu_custom_call.1} parent=1 // loop_exit
      _
    %340 = vsyncpa [#allocation3], 1
    %s341 = scalar_lea.sflag [#allocation3], 1
    %342 = vsyncpa %s341, 1
    %343 = vsyncpa [#allocation4], 1
    %s344 = scalar_lea.sflag [#allocation4], 1
    %345 = vsyncpa %s344, 1

</llo_original>
